<compile_context>
chip_gen: v7x
topology: tpu7x:2x2x1
jax: 0.10.0
libtpu: 0.0.40
codegen_flags: <defaults>
</compile_context>

<pallas_src>
import jax
import jax.numpy as jnp
from jax.experimental import pallas as pl
from jax.experimental.pallas import tpu as pltpu


def _round_up(n, m):
    return (n + m - 1) // m * m


def rnn_fc_kernel(x_ref, p1_ref, p2_ref, o_ref):
    """Whole forward pass in one invocation.

    x_ref  : (B, T, D)  input, batch_first (as given by the caller, no copy)
    p1_ref : (ru(D,8)+ru(H,8)+1, H) slab = [W_ih^T ; pad ; W_hh^T ; b_ih+b_hh]
    p2_ref : (ru(H,8)+1, O)         slab = [W_fc^T ; b_fc]
    o_ref  : (B, O)
    """
    B, T, D = x_ref.shape
    H = p1_ref.shape[1]
    O = o_ref.shape[1]
    off_whh = _round_up(D, 8)
    off_b = off_whh + _round_up(H, 8)
    off_bfc = _round_up(H, 8)

    # Unpack parameter slabs (static, sublane-aligned row slices).
    wih = p1_ref[0:D, :]                        # (D, H) = W_ih^T
    whh = p1_ref[off_whh:off_whh + H, :]        # (H, H) = W_hh^T
    bias = p1_ref[off_b:off_b + 1, :]           # (1, H) = b_ih + b_hh (fused)
    wfc = p2_ref[0:H, :]                        # (H, O) = W_fc^T
    bfc = p2_ref[off_bfc:off_bfc + 1, :]        # (1, O)

    # B independent recurrence chains; they share no data, so the LLO
    # scheduler interleaves them and hides per-step MXU/EUP latency.
    h_last = []
    for bi in range(B):
        xb = x_ref[bi]                          # (T, D) contiguous rows
        # Hoisted input projection for all timesteps of this sequence:
        # independent of h, so it is off the serial critical path.
        xp = jnp.dot(xb, wih, preferred_element_type=jnp.float32) + bias  # (T, H)
        # t = 0: initial hidden state is zeros -> skip the recurrent matmul.
        h = jnp.tanh(xp[0:1, :])                # (1, H)
        # TODO(synk): drive the MXU weight-stationary (pltpu.matmul_push_rhs /
        # matmul_acc_lhs / matmul_pop) to keep W_hh^T resident across steps.
        for t in range(1, T):
            h = jnp.tanh(
                xp[t:t + 1, :]
                + jnp.dot(h, whh, preferred_element_type=jnp.float32))
        h_last.append(h)

    h_all = jnp.concatenate(h_last, axis=0)     # (B, H)
    # Final Linear on the last hidden state: out = h_T @ W_fc^T + b_fc.
    # TODO(synk): O=96 (<128 lanes) makes this a masked store; pad O to 128 if
    # the caller can accept/strip padded output.
    o_ref[...] = jnp.dot(h_all, wfc, preferred_element_type=jnp.float32) + bfc


def prepare_rnn_params(w_ih, w_hh, b_ih, b_hh, w_fc, b_fc):
    """ONE-TIME (model init) layout prep — not per forward call.

    PyTorch-convention weights: w_ih (H, D), w_hh (H, H), b_ih (H,), b_hh (H,),
    w_fc (96, H), b_fc (96,).  Returns two packed f32 slabs:
      p1: [W_ih^T ; pad ; W_hh^T ; (b_ih + b_hh)] with 8-row-aligned segments
      p2: [W_fc^T ; b_fc]                          with 8-row-aligned segments
    """
    H, D = w_ih.shape
    O = w_fc.shape[0]

    off_whh = _round_up(D, 8)
    off_b = off_whh + _round_up(H, 8)
    p1 = jnp.zeros((off_b + 1, H), jnp.float32)
    p1 = p1.at[0:D, :].set(w_ih.T.astype(jnp.float32))
    p1 = p1.at[off_whh:off_whh + H, :].set(w_hh.T.astype(jnp.float32))
    p1 = p1.at[off_b, :].set((b_ih + b_hh).astype(jnp.float32))

    off_bfc = _round_up(H, 8)
    p2 = jnp.zeros((off_bfc + 1, O), jnp.float32)
    p2 = p2.at[0:H, :].set(w_fc.T.astype(jnp.float32))
    p2 = p2.at[off_bfc, :].set(b_fc.astype(jnp.float32))
    return p1, p2


def rnn_model_forward(x, p1, p2):
    """x: (B, T, D) float32 (batch_first); p1/p2 from prepare_rnn_params.
    Returns (B, 96)."""
    B, T, D = x.shape
    O = p2.shape[1]
    vmem = pl.BlockSpec(memory_space=pltpu.MemorySpace.VMEM)

    # Single invocation (no grid): all operands are a few KiB and fully
    # VMEM-resident; a grid would only add ~0.35 us/step pipeline overhead on
    # single-TC v5e/v6e.
    # TODO(synk): for large B on v7x, add a "parallel" batch grid axis
    # (dimension_semantics=("parallel",)) so each of the two TensorCores runs
    # half the batch's recurrence, and budget against v7x's 64 MiB VMEM.
    return pl.pallas_call(
        rnn_fc_kernel,
        out_shape=jax.ShapeDtypeStruct((B, O), jnp.float32),
        in_specs=[vmem, vmem, vmem],
        out_specs=vmem,
    )(x.astype(jnp.float32), p1, p2)


def rnn_model_reference(x, w_ih, w_hh, b_ih, b_hh, w_fc, b_fc):
    """Pure-JAX reference mirroring torch.nn.RNN(tanh, batch_first) + Linear."""
    B, T, D = x.shape
    H = w_ih.shape[0]
    h = jnp.zeros((B, H), jnp.float32)

    def step(h, x_t):
        h_new = jnp.tanh(x_t @ w_ih.T + b_ih + h @ w_hh.T + b_hh)
        return h_new, None

    h_last, _ = jax.lax.scan(step, h, jnp.swapaxes(x, 0, 1))
    return h_last @ w_fc.T + b_fc


if __name__ == "__main__":
    # Small shapes consistent with the module's forward: x (B, T, input_size)
    B, T, D, H, O = 2, 8, 16, 32, 96

    key = jax.random.PRNGKey(0)
    ks = jax.random.split(key, 7)
    # PyTorch-style uniform(-1/sqrt(H), 1/sqrt(H)) init, deterministic.
    bound = 1.0 / jnp.sqrt(jnp.float32(H))
    w_ih = jax.random.uniform(ks[0], (H, D), jnp.float32, -bound, bound)
    w_hh = jax.random.uniform(ks[1], (H, H), jnp.float32, -bound, bound)
    b_ih = jax.random.uniform(ks[2], (H,), jnp.float32, -bound, bound)
    b_hh = jax.random.uniform(ks[3], (H,), jnp.float32, -bound, bound)
    w_fc = jax.random.uniform(ks[4], (O, H), jnp.float32, -bound, bound)
    b_fc = jax.random.uniform(ks[5], (O,), jnp.float32, -bound, bound)
    x = jax.random.normal(ks[6], (B, T, D), jnp.float32)

    # One-time weight layout prep (init-time); per-call forward only DMAs
    # three operands (x and two packed parameter slabs).
    p1, p2 = jax.block_until_ready(
        prepare_rnn_params(w_ih, w_hh, b_ih, b_hh, w_fc, b_fc))

    out = rnn_model_forward(x, p1, p2)
    out = jax.block_until_ready(out)

    ref = rnn_model_reference(x, w_ih, w_hh, b_ih, b_hh, w_fc, b_fc)
    assert out.shape == (B, O), out.shape
    assert jnp.allclose(out, ref, atol=1e-5, rtol=1e-5), \
        float(jnp.max(jnp.abs(out - ref)))

    print("KERNEL_OK")
</pallas_src>

<mosaic_0001>
module attributes {stable_mosaic.version = 11 : i64} {
  func.func @rnn_fc_kernel(%arg0: memref<2x8x16xf32, #tpu.memory_space<vmem>>, %arg1: memref<49x32xf32, #tpu.memory_space<vmem>>, %arg2: memref<33x96xf32, #tpu.memory_space<vmem>>, %arg3: memref<2x96xf32, #tpu.memory_space<vmem>>) attributes {dimension_semantics = [], scalar_prefetch = 0 : i64, scratch_operands = 0 : i64, tpu.core_type = #tpu.core_type<tc>} {
    %c0 = arith.constant 0 : index
    %c0_0 = arith.constant 0 : index
    %0 = vector.load %arg1[%c0, %c0_0] : memref<49x32xf32, #tpu.memory_space<vmem>>, vector<16x32xf32>
    %c16 = arith.constant 16 : index
    %c0_1 = arith.constant 0 : index
    %1 = vector.load %arg1[%c16, %c0_1] : memref<49x32xf32, #tpu.memory_space<vmem>>, vector<32x32xf32>
    %c48 = arith.constant 48 : index
    %c0_2 = arith.constant 0 : index
    %2 = vector.load %arg1[%c48, %c0_2] : memref<49x32xf32, #tpu.memory_space<vmem>>, vector<1x32xf32>
    %c0_3 = arith.constant 0 : index
    %c0_4 = arith.constant 0 : index
    %3 = vector.load %arg2[%c0_3, %c0_4] : memref<33x96xf32, #tpu.memory_space<vmem>>, vector<32x96xf32>
    %c32 = arith.constant 32 : index
    %c0_5 = arith.constant 0 : index
    %4 = vector.load %arg2[%c32, %c0_5] : memref<33x96xf32, #tpu.memory_space<vmem>>, vector<1x96xf32>
    %c0_6 = arith.constant 0 : index
    %c0_7 = arith.constant 0 : index
    %c0_8 = arith.constant 0 : index
    %5 = vector.load %arg0[%c0_6, %c0_7, %c0_8] : memref<2x8x16xf32, #tpu.memory_space<vmem>>, vector<1x8x16xf32>
    %6 = vector.shape_cast %5 : vector<1x8x16xf32> to vector<8x16xf32>
    %cst = arith.constant dense<0.000000e+00> : vector<8x32xf32>
    %7 = tpu.matmul %6, %0, %cst {dimension_numbers = #tpu.dot_dimension_numbers<[1], [0], [0], [1], [0, 0, 1, 1], [], []>} : vector<8x16xf32>, vector<16x32xf32>, vector<8x32xf32> -> vector<8x32xf32>
    %8 = vector.broadcast %2 : vector<1x32xf32> to vector<8x32xf32>
    %9 = arith.addf %7, %8 : vector<8x32xf32>
    %10 = vector.extract_strided_slice %9 {offsets = [0, 0], sizes = [1, 32], strides = [1, 1]} : vector<8x32xf32> to vector<1x32xf32>
    %11 = math.tanh %10 : vector<1x32xf32>
    %12 = vector.extract_strided_slice %9 {offsets = [1, 0], sizes = [1, 32], strides = [1, 1]} : vector<8x32xf32> to vector<1x32xf32>
    %cst_9 = arith.constant dense<0.000000e+00> : vector<1x32xf32>
    %13 = tpu.matmul %11, %1, %cst_9 {dimension_numbers = #tpu.dot_dimension_numbers<[1], [0], [0], [1], [0, 0, 1, 1], [], []>} : vector<1x32xf32>, vector<32x32xf32>, vector<1x32xf32> -> vector<1x32xf32>
    %14 = arith.addf %12, %13 : vector<1x32xf32>
    %15 = math.tanh %14 : vector<1x32xf32>
    %16 = vector.extract_strided_slice %9 {offsets = [2, 0], sizes = [1, 32], strides = [1, 1]} : vector<8x32xf32> to vector<1x32xf32>
    %cst_10 = arith.constant dense<0.000000e+00> : vector<1x32xf32>
    %17 = tpu.matmul %15, %1, %cst_10 {dimension_numbers = #tpu.dot_dimension_numbers<[1], [0], [0], [1], [0, 0, 1, 1], [], []>} : vector<1x32xf32>, vector<32x32xf32>, vector<1x32xf32> -> vector<1x32xf32>
    %18 = arith.addf %16, %17 : vector<1x32xf32>
    %19 = math.tanh %18 : vector<1x32xf32>
    %20 = vector.extract_strided_slice %9 {offsets = [3, 0], sizes = [1, 32], strides = [1, 1]} : vector<8x32xf32> to vector<1x32xf32>
    %cst_11 = arith.constant dense<0.000000e+00> : vector<1x32xf32>
    %21 = tpu.matmul %19, %1, %cst_11 {dimension_numbers = #tpu.dot_dimension_numbers<[1], [0], [0], [1], [0, 0, 1, 1], [], []>} : vector<1x32xf32>, vector<32x32xf32>, vector<1x32xf32> -> vector<1x32xf32>
    %22 = arith.addf %20, %21 : vector<1x32xf32>
    %23 = math.tanh %22 : vector<1x32xf32>
    %24 = vector.extract_strided_slice %9 {offsets = [4, 0], sizes = [1, 32], strides = [1, 1]} : vector<8x32xf32> to vector<1x32xf32>
    %cst_12 = arith.constant dense<0.000000e+00> : vector<1x32xf32>
    %25 = tpu.matmul %23, %1, %cst_12 {dimension_numbers = #tpu.dot_dimension_numbers<[1], [0], [0], [1], [0, 0, 1, 1], [], []>} : vector<1x32xf32>, vector<32x32xf32>, vector<1x32xf32> -> vector<1x32xf32>
    %26 = arith.addf %24, %25 : vector<1x32xf32>
    %27 = math.tanh %26 : vector<1x32xf32>
    %28 = vector.extract_strided_slice %9 {offsets = [5, 0], sizes = [1, 32], strides = [1, 1]} : vector<8x32xf32> to vector<1x32xf32>
    %cst_13 = arith.constant dense<0.000000e+00> : vector<1x32xf32>
    %29 = tpu.matmul %27, %1, %cst_13 {dimension_numbers = #tpu.dot_dimension_numbers<[1], [0], [0], [1], [0, 0, 1, 1], [], []>} : vector<1x32xf32>, vector<32x32xf32>, vector<1x32xf32> -> vector<1x32xf32>
    %30 = arith.addf %28, %29 : vector<1x32xf32>
    %31 = math.tanh %30 : vector<1x32xf32>
    %32 = vector.extract_strided_slice %9 {offsets = [6, 0], sizes = [1, 32], strides = [1, 1]} : vector<8x32xf32> to vector<1x32xf32>
    %cst_14 = arith.constant dense<0.000000e+00> : vector<1x32xf32>
    %33 = tpu.matmul %31, %1, %cst_14 {dimension_numbers = #tpu.dot_dimension_numbers<[1], [0], [0], [1], [0, 0, 1, 1], [], []>} : vector<1x32xf32>, vector<32x32xf32>, vector<1x32xf32> -> vector<1x32xf32>
    %34 = arith.addf %32, %33 : vector<1x32xf32>
    %35 = math.tanh %34 : vector<1x32xf32>
    %36 = vector.extract_strided_slice %9 {offsets = [7, 0], sizes = [1, 32], strides = [1, 1]} : vector<8x32xf32> to vector<1x32xf32>
    %cst_15 = arith.constant dense<0.000000e+00> : vector<1x32xf32>
    %37 = tpu.matmul %35, %1, %cst_15 {dimension_numbers = #tpu.dot_dimension_numbers<[1], [0], [0], [1], [0, 0, 1, 1], [], []>} : vector<1x32xf32>, vector<32x32xf32>, vector<1x32xf32> -> vector<1x32xf32>
    %38 = arith.addf %36, %37 : vector<1x32xf32>
    %39 = math.tanh %38 : vector<1x32xf32>
    %c1 = arith.constant 1 : index
    %c0_16 = arith.constant 0 : index
    %c0_17 = arith.constant 0 : index
    %40 = vector.load %arg0[%c1, %c0_16, %c0_17] : memref<2x8x16xf32, #tpu.memory_space<vmem>>, vector<1x8x16xf32>
    %41 = vector.shape_cast %40 : vector<1x8x16xf32> to vector<8x16xf32>
    %cst_18 = arith.constant dense<0.000000e+00> : vector<8x32xf32>
    %42 = tpu.matmul %41, %0, %cst_18 {dimension_numbers = #tpu.dot_dimension_numbers<[1], [0], [0], [1], [0, 0, 1, 1], [], []>} : vector<8x16xf32>, vector<16x32xf32>, vector<8x32xf32> -> vector<8x32xf32>
    %43 = vector.broadcast %2 : vector<1x32xf32> to vector<8x32xf32>
    %44 = arith.addf %42, %43 : vector<8x32xf32>
    %45 = vector.extract_strided_slice %44 {offsets = [0, 0], sizes = [1, 32], strides = [1, 1]} : vector<8x32xf32> to vector<1x32xf32>
    %46 = math.tanh %45 : vector<1x32xf32>
    %47 = vector.extract_strided_slice %44 {offsets = [1, 0], sizes = [1, 32], strides = [1, 1]} : vector<8x32xf32> to vector<1x32xf32>
    %cst_19 = arith.constant dense<0.000000e+00> : vector<1x32xf32>
    %48 = tpu.matmul %46, %1, %cst_19 {dimension_numbers = #tpu.dot_dimension_numbers<[1], [0], [0], [1], [0, 0, 1, 1], [], []>} : vector<1x32xf32>, vector<32x32xf32>, vector<1x32xf32> -> vector<1x32xf32>
    %49 = arith.addf %47, %48 : vector<1x32xf32>
    %50 = math.tanh %49 : vector<1x32xf32>
    %51 = vector.extract_strided_slice %44 {offsets = [2, 0], sizes = [1, 32], strides = [1, 1]} : vector<8x32xf32> to vector<1x32xf32>
    %cst_20 = arith.constant dense<0.000000e+00> : vector<1x32xf32>
    %52 = tpu.matmul %50, %1, %cst_20 {dimension_numbers = #tpu.dot_dimension_numbers<[1], [0], [0], [1], [0, 0, 1, 1], [], []>} : vector<1x32xf32>, vector<32x32xf32>, vector<1x32xf32> -> vector<1x32xf32>
    %53 = arith.addf %51, %52 : vector<1x32xf32>
    %54 = math.tanh %53 : vector<1x32xf32>
    %55 = vector.extract_strided_slice %44 {offsets = [3, 0], sizes = [1, 32], strides = [1, 1]} : vector<8x32xf32> to vector<1x32xf32>
    %cst_21 = arith.constant dense<0.000000e+00> : vector<1x32xf32>
    %56 = tpu.matmul %54, %1, %cst_21 {dimension_numbers = #tpu.dot_dimension_numbers<[1], [0], [0], [1], [0, 0, 1, 1], [], []>} : vector<1x32xf32>, vector<32x32xf32>, vector<1x32xf32> -> vector<1x32xf32>
    %57 = arith.addf %55, %56 : vector<1x32xf32>
    %58 = math.tanh %57 : vector<1x32xf32>
    %59 = vector.extract_strided_slice %44 {offsets = [4, 0], sizes = [1, 32], strides = [1, 1]} : vector<8x32xf32> to vector<1x32xf32>
    %cst_22 = arith.constant dense<0.000000e+00> : vector<1x32xf32>
    %60 = tpu.matmul %58, %1, %cst_22 {dimension_numbers = #tpu.dot_dimension_numbers<[1], [0], [0], [1], [0, 0, 1, 1], [], []>} : vector<1x32xf32>, vector<32x32xf32>, vector<1x32xf32> -> vector<1x32xf32>
    %61 = arith.addf %59, %60 : vector<1x32xf32>
    %62 = math.tanh %61 : vector<1x32xf32>
    %63 = vector.extract_strided_slice %44 {offsets = [5, 0], sizes = [1, 32], strides = [1, 1]} : vector<8x32xf32> to vector<1x32xf32>
    %cst_23 = arith.constant dense<0.000000e+00> : vector<1x32xf32>
    %64 = tpu.matmul %62, %1, %cst_23 {dimension_numbers = #tpu.dot_dimension_numbers<[1], [0], [0], [1], [0, 0, 1, 1], [], []>} : vector<1x32xf32>, vector<32x32xf32>, vector<1x32xf32> -> vector<1x32xf32>
    %65 = arith.addf %63, %64 : vector<1x32xf32>
    %66 = math.tanh %65 : vector<1x32xf32>
    %67 = vector.extract_strided_slice %44 {offsets = [6, 0], sizes = [1, 32], strides = [1, 1]} : vector<8x32xf32> to vector<1x32xf32>
    %cst_24 = arith.constant dense<0.000000e+00> : vector<1x32xf32>
    %68 = tpu.matmul %66, %1, %cst_24 {dimension_numbers = #tpu.dot_dimension_numbers<[1], [0], [0], [1], [0, 0, 1, 1], [], []>} : vector<1x32xf32>, vector<32x32xf32>, vector<1x32xf32> -> vector<1x32xf32>
    %69 = arith.addf %67, %68 : vector<1x32xf32>
    %70 = math.tanh %69 : vector<1x32xf32>
    %71 = vector.extract_strided_slice %44 {offsets = [7, 0], sizes = [1, 32], strides = [1, 1]} : vector<8x32xf32> to vector<1x32xf32>
    %cst_25 = arith.constant dense<0.000000e+00> : vector<1x32xf32>
    %72 = tpu.matmul %70, %1, %cst_25 {dimension_numbers = #tpu.dot_dimension_numbers<[1], [0], [0], [1], [0, 0, 1, 1], [], []>} : vector<1x32xf32>, vector<32x32xf32>, vector<1x32xf32> -> vector<1x32xf32>
    %73 = arith.addf %71, %72 : vector<1x32xf32>
    %74 = math.tanh %73 : vector<1x32xf32>
    %75 = tpu.concatenate %39, %74 in 0 : vector<1x32xf32>, vector<1x32xf32> -> vector<2x32xf32>
    %cst_26 = arith.constant dense<0.000000e+00> : vector<2x96xf32>
    %76 = tpu.matmul %75, %3, %cst_26 {dimension_numbers = #tpu.dot_dimension_numbers<[1], [0], [0], [1], [0, 0, 1, 1], [], []>} : vector<2x32xf32>, vector<32x96xf32>, vector<2x96xf32> -> vector<2x96xf32>
    %77 = vector.broadcast %4 : vector<1x96xf32> to vector<2x96xf32>
    %78 = arith.addf %76, %77 : vector<2x96xf32>
    %c0_27 = arith.constant 0 : index
    %c0_28 = arith.constant 0 : index
    %79 = vector.load %arg3[%c0_27, %c0_28] : memref<2x96xf32, #tpu.memory_space<vmem>>, vector<2x96xf32>
    tpu.vector_store %arg3[%c0_27, %c0_28], %78 {strides = array<i32>} : memref<2x96xf32, #tpu.memory_space<vmem>>, vector<2x96xf32>,
    return
  }
}

</mosaic_0001>

<llo_original>
// kernel: tpu_custom_call.1
$region0: #{tpu_custom_call.1}
  #allocation0 [shape = 'u32[]', space=smem, size = 0x4, offset = 0x4, fixed_abs, tag = 'smem constant byte address 0x4 - core index']
  #allocation1 [shape = 'u32[144,128]{1,0:T(1,128)}', space=vmem, size = 0x12000, scoped, tag = 'internal scratch']
  %s0 = inlined_call_operand.vmem [shape: f32[2,8,16], index: 0, kind: input, shape index: {}]
  %s1 = inlined_call_operand.vmem [shape: f32[49,32], index: 1, kind: input, shape index: {}]
  %s2 = inlined_call_operand.vmem [shape: f32[33,96], index: 2, kind: input, shape index: {}]
  %s3 = inlined_call_operand.hbm [shape: f32[2,96], index: 3, kind: output, shape index: {}]
  %s4 = sld [smem:[#allocation0]]
  $region22: #{tpu_custom_call.1} parent=0
    _
  %s6 = ssub.s32 1, %s4
  %s7 = scalar_select 0, %s6, %s4
  $region1: #{tpu_custom_call.1} parent=0
    #allocation2 [shape = 'u8[1024]{0}', space=vmem, size = 0x400, scoped, tag = 'output window, operand 0, single buffered']
    #allocation3 [shape = 's32[1]{0}', space=sflag, size = 0x4, scoped, tag = 'scoped memory for tpu_custom_call.1']
    %8 = vsyncpa [#allocation3], 0
    // Predicated region
    $region2: #{tpu_custom_call.1} parent=1 // pred_check
      _
    $region3: #{tpu_custom_call.1} parent=1 // pred_check_branch
      %10 = sbr.rel (0) target = $region5
    $region4: #{tpu_custom_call.1} parent=1 // pred_region
      _
    $region5: #{tpu_custom_call.1} parent=1 // pred_fallthru
      _
    // Predicated region
    $region6: #{tpu_custom_call.1} parent=1 // pred_check
      _
    $region7: #{tpu_custom_call.1} parent=1 // pred_check_branch
      %12 = sbr.rel (0) target = $region9
    $region8: #{tpu_custom_call.1} parent=1 // pred_region
      _
    $region9: #{tpu_custom_call.1} parent=1 // pred_fallthru
      _
    // Predicated region
    $region10: #{tpu_custom_call.1} parent=1 // pred_check
      _
    $region11: #{tpu_custom_call.1} parent=1 // pred_check_branch
      %14 = sbr.rel (0) target = $region13
    $region12: #{tpu_custom_call.1} parent=1 // pred_region
      _
    $region13: #{tpu_custom_call.1} parent=1 // pred_fallthru
      _
    %v15 = vld [vmem:[%s1] sm:$0xff]
    %v16 = vld [vmem:[%s1 + $0x8] sm:$0xff]
    %v17 = vld [vmem:[%s1 + $0x10] sm:$0xff]
    %v18 = vld [vmem:[%s1 + $0x18] sm:$0xff]
    %v19 = vld [vmem:[%s1 + $0x20] sm:$0xff]
    %v20 = vld [vmem:[%s1 + $0x28] sm:$0xff]
    %v21 = vld [vmem:[%s1 + $0x30] sm:$0x1]
    %v22 = vld [vmem:[%s2] sm:$0xff]
    %v23 = vld [vmem:[%s2 + $0x8] sm:$0xff]
    %v24 = vld [vmem:[%s2 + $0x10] sm:$0xff]
    %v25 = vld [vmem:[%s2 + $0x18] sm:$0xff]
    %v26 = vld [vmem:[%s2 + $0x20] sm:$0x1]
    %v27 = vld [vmem:[%s0] sm:$0xff]
    %v28 = vlaneseq
    %v29 = vshrl.u32 %v28, 7
    %v30 = vsub.s32 0, %v29
    %v31 = vrot.slane %v21, %v30
    %vm32 = vcmask 130048
    %v34 = vsel %vm32, %v27, 0
    %36 = vmatprep.subr.mxu0 0.0
    %37 = vmatpush1.msra.mxu0 %v15
    %38 = vmatprep.subr.mxu0 0.0
    %39 = vmatpush1.msra.mxu0 %v16
    %40 = vmatprep.subr.mxu0 0.0
    %41 = vmatpush1.msra.mxu0 0.0
    %42 = vmatprep.subr.mxu0 0.0
    %43 = vmatpush1.msra.mxu0 0.0
    %44 = vmatprep.subr.mxu0 0.0
    %45 = vmatpush1.msra.mxu0 0.0
    %46 = vmatprep.subr.mxu0 0.0
    %47 = vmatpush1.msra.mxu0 0.0
    %48 = vmatprep.subr.mxu0 0.0
    %49 = vmatpush1.msra.mxu0 0.0
    %50 = vmatprep.subr.mxu0 0.0
    %51 = vmatpush1.msra.mxu0 0.0
    %52 = vmatprep.subr.mxu0 0.0
    %53 = vmatpush1.msra.mxu0 0.0
    %54 = vmatprep.subr.mxu0 0.0
    %55 = vmatpush1.msra.mxu0 0.0
    %56 = vmatprep.subr.mxu0 0.0
    %57 = vmatpush1.msra.mxu0 0.0
    %58 = vmatprep.subr.mxu0 0.0
    %59 = vmatpush1.msra.mxu0 0.0
    %60 = vmatprep.subr.mxu0 0.0
    %61 = vmatpush1.msra.mxu0 0.0
    %62 = vmatprep.subr.mxu0 0.0
    %63 = vmatpush1.msra.mxu0 0.0
    %64 = vmatprep.subr.mxu0 0.0
    %65 = vmatpush1.msra.mxu0 0.0
    %66 = vmatprep.subr.mxu0 0.0
    %67 = vmatpush1.msra.mxu0 0.0
    %68 = vmatprep.subr.mxu0 0.0
    %69 = vmatpush1.msra.mxu0 0.0
    %70 = vmatprep.subr.mxu0 0.0
    %71 = vmatpush1.msra.mxu0 0.0
    %72 = vmatprep.subr.mxu0 0.0
    %73 = vmatpush1.msra.mxu0 0.0
    %74 = vmatprep.subr.mxu0 0.0
    %75 = vmatpush1.msra.mxu0 0.0
    %76 = vmatprep.subr.mxu0 0.0
    %77 = vmatpush1.msra.mxu0 0.0
    %78 = vmatprep.subr.mxu0 0.0
    %79 = vmatpush1.msra.mxu0 0.0
    %80 = vmatprep.subr.mxu0 0.0
    %81 = vmatpush1.msra.mxu0 0.0
    %82 = vmatprep.subr.mxu0 0.0
    %83 = vmatpush1.msra.mxu0 0.0
    %84 = vmatprep.subr.mxu0 0.0
    %85 = vmatpush1.msra.mxu0 0.0
    %86 = vmatprep.subr.mxu0 0.0
    %87 = vmatpush1.msra.mxu0 0.0
    %88 = vmatprep.subr.mxu0 0.0
    %89 = vmatpush1.msra.mxu0 0.0
    %90 = vmatprep.subr.mxu0 0.0
    %91 = vmatpush1.msra.mxu0 0.0
    %92 = vmatprep.subr.mxu0 0.0
    %93 = vmatpush1.msra.mxu0 0.0
    %94 = vmatprep.subr.mxu0 0.0
    %95 = vmatpush1.msra.mxu0 0.0
    %96 = vmatprep.subr.mxu0 0.0
    %97 = vmatpush1.msra.mxu0 0.0
    %98 = vmatprep.subr.mxu0 0.0
    %99 = vmatpush1.msra.mxu0 0.0
    %100 = vmatprep.mubr.f32.mxu0 0.0
    %101 = vmatmul.mubr.f32.gmra.mrb[0].mxu0 %v34
    %v102 = vpop.f32.mrb[0].mxu0
    %v103 = vadd.f32 %v31, %v102
    %v104 = vpop.f32.mrb[0].mxu0
    %105 = vdwg.mxu0
    %v106 = vtanh.pop %v103
    %vm107 = vcmask 261120
    %v109 = vsel %vm107, %v106, 0
    %111 = vmatprep.subr.mxu0 0.0
    %112 = vmatpush1.msra.mxu0 %v17
    %113 = vmatprep.subr.mxu0 0.0
    %114 = vmatpush1.msra.mxu0 %v18
    %115 = vmatprep.subr.mxu0 0.0
    %116 = vmatpush1.msra.mxu0 %v19
    %117 = vmatprep.subr.mxu0 0.0
    %118 = vmatpush1.msra.mxu0 %v20
    %119 = vmatprep.subr.mxu0 0.0
    %120 = vmatpush1.msra.mxu0 0.0
    %121 = vmatprep.subr.mxu0 0.0
    %122 = vmatpush1.msra.mxu0 0.0
    %123 = vmatprep.subr.mxu0 0.0
    %124 = vmatpush1.msra.mxu0 0.0
    %125 = vmatprep.subr.mxu0 0.0
    %126 = vmatpush1.msra.mxu0 0.0
    %127 = vmatprep.subr.mxu0 0.0
    %128 = vmatpush1.msra.mxu0 0.0
    %129 = vmatprep.subr.mxu0 0.0
    %130 = vmatpush1.msra.mxu0 0.0
    %131 = vmatprep.subr.mxu0 0.0
    %132 = vmatpush1.msra.mxu0 0.0
    %133 = vmatprep.subr.mxu0 0.0
    %134 = vmatpush1.msra.mxu0 0.0
    %135 = vmatprep.subr.mxu0 0.0
    %136 = vmatpush1.msra.mxu0 0.0
    %137 = vmatprep.subr.mxu0 0.0
    %138 = vmatpush1.msra.mxu0 0.0
    %139 = vmatprep.subr.mxu0 0.0
    %140 = vmatpush1.msra.mxu0 0.0
    %141 = vmatprep.subr.mxu0 0.0
    %142 = vmatpush1.msra.mxu0 0.0
    %143 = vmatprep.subr.mxu0 0.0
    %144 = vmatpush1.msra.mxu0 0.0
    %145 = vmatprep.subr.mxu0 0.0
    %146 = vmatpush1.msra.mxu0 0.0
    %147 = vmatprep.subr.mxu0 0.0
    %148 = vmatpush1.msra.mxu0 0.0
    %149 = vmatprep.subr.mxu0 0.0
    %150 = vmatpush1.msra.mxu0 0.0
    %151 = vmatprep.subr.mxu0 0.0
    %152 = vmatpush1.msra.mxu0 0.0
    %153 = vmatprep.subr.mxu0 0.0
    %154 = vmatpush1.msra.mxu0 0.0
    %155 = vmatprep.subr.mxu0 0.0
    %156 = vmatpush1.msra.mxu0 0.0
    %157 = vmatprep.subr.mxu0 0.0
    %158 = vmatpush1.msra.mxu0 0.0
    %159 = vmatprep.subr.mxu0 0.0
    %160 = vmatpush1.msra.mxu0 0.0
    %161 = vmatprep.subr.mxu0 0.0
    %162 = vmatpush1.msra.mxu0 0.0
    %163 = vmatprep.subr.mxu0 0.0
    %164 = vmatpush1.msra.mxu0 0.0
    %165 = vmatprep.subr.mxu0 0.0
    %166 = vmatpush1.msra.mxu0 0.0
    %167 = vmatprep.subr.mxu0 0.0
    %168 = vmatpush1.msra.mxu0 0.0
    %169 = vmatprep.subr.mxu0 0.0
    %170 = vmatpush1.msra.mxu0 0.0
    %171 = vmatprep.subr.mxu0 0.0
    %172 = vmatpush1.msra.mxu0 0.0
    %173 = vmatprep.subr.mxu0 0.0
    %174 = vmatpush1.msra.mxu0 0.0
    %175 = vmatprep.mubr.f32.mxu0 0.0
    %176 = vmatmul.mubr.f32.gmra.mrb[0].mxu0 %v109
    %v177 = vpop.f32.mrb[0].mxu0
    %v178 = vadd.f32 0.0, %v177
    %v179 = vpop.f32.mrb[0].mxu0
    %180 = vdwg.mxu0
    %v182 = vrot.slane %v178, 7
    %v184 = vadd.f32 %v103, %v182
    %v185 = vtanh.pop %v184
    %v187 = vrot.slane %v185, 1
    %v188 = vsel %vm107, %v187, 0
    %190 = vmatprep.subr.mxu0 0.0
    %191 = vmatpush1.msra.mxu0 %v17
    %192 = vmatprep.subr.mxu0 0.0
    %193 = vmatpush1.msra.mxu0 %v18
    %194 = vmatprep.subr.mxu0 0.0
    %195 = vmatpush1.msra.mxu0 %v19
    %196 = vmatprep.subr.mxu0 0.0
    %197 = vmatpush1.msra.mxu0 %v20
    %198 = vmatprep.subr.mxu0 0.0
    %199 = vmatpush1.msra.mxu0 0.0
    %200 = vmatprep.subr.mxu0 0.0
    %201 = vmatpush1.msra.mxu0 0.0
    %202 = vmatprep.subr.mxu0 0.0
    %203 = vmatpush1.msra.mxu0 0.0
    %204 = vmatprep.subr.mxu0 0.0
    %205 = vmatpush1.msra.mxu0 0.0
    %206 = vmatprep.subr.mxu0 0.0
    %207 = vmatpush1.msra.mxu0 0.0
    %208 = vmatprep.subr.mxu0 0.0
    %209 = vmatpush1.msra.mxu0 0.0
    %210 = vmatprep.subr.mxu0 0.0
    %211 = vmatpush1.msra.mxu0 0.0
    %212 = vmatprep.subr.mxu0 0.0
    %213 = vmatpush1.msra.mxu0 0.0
    %214 = vmatprep.subr.mxu0 0.0
    %215 = vmatpush1.msra.mxu0 0.0
    %216 = vmatprep.subr.mxu0 0.0
    %217 = vmatpush1.msra.mxu0 0.0
    %218 = vmatprep.subr.mxu0 0.0
    %219 = vmatpush1.msra.mxu0 0.0
    %220 = vmatprep.subr.mxu0 0.0
    %221 = vmatpush1.msra.mxu0 0.0
    %222 = vmatprep.subr.mxu0 0.0
    %223 = vmatpush1.msra.mxu0 0.0
    %224 = vmatprep.subr.mxu0 0.0
    %225 = vmatpush1.msra.mxu0 0.0
    %226 = vmatprep.subr.mxu0 0.0
    %227 = vmatpush1.msra.mxu0 0.0
    %228 = vmatprep.subr.mxu0 0.0
    %229 = vmatpush1.msra.mxu0 0.0
    %230 = vmatprep.subr.mxu0 0.0
    %231 = vmatpush1.msra.mxu0 0.0
    %232 = vmatprep.subr.mxu0 0.0
    %233 = vmatpush1.msra.mxu0 0.0
    %234 = vmatprep.subr.mxu0 0.0
    %235 = vmatpush1.msra.mxu0 0.0
    %236 = vmatprep.subr.mxu0 0.0
    %237 = vmatpush1.msra.mxu0 0.0
    %238 = vmatprep.subr.mxu0 0.0
    %239 = vmatpush1.msra.mxu0 0.0
    %240 = vmatprep.subr.mxu0 0.0
    %241 = vmatpush1.msra.mxu0 0.0
    %242 = vmatprep.subr.mxu0 0.0
    %243 = vmatpush1.msra.mxu0 0.0
    %244 = vmatprep.subr.mxu0 0.0
    %245 = vmatpush1.msra.mxu0 0.0
    %246 = vmatprep.subr.mxu0 0.0
    %247 = vmatpush1.msra.mxu0 0.0
    %248 = vmatprep.subr.mxu0 0.0
    %249 = vmatpush1.msra.mxu0 0.0
    %250 = vmatprep.subr.mxu0 0.0
    %251 = vmatpush1.msra.mxu0 0.0
    %252 = vmatprep.subr.mxu0 0.0
    %253 = vmatpush1.msra.mxu0 0.0
    %254 = vmatprep.mubr.f32.mxu0 0.0
    %255 = vmatmul.mubr.f32.gmra.mrb[0].mxu0 %v188
    %v256 = vpop.f32.mrb[0].mxu0
    %v257 = vadd.f32 0.0, %v256
    %v258 = vpop.f32.mrb[0].mxu0
    %259 = vdwg.mxu0
    %v261 = vrot.slane %v257, 6
    %v263 = vadd.f32 %v103, %v261
    %v264 = vtanh.pop %v263
    %v266 = vrot.slane %v264, 2
    %v267 = vsel %vm107, %v266, 0
    %269 = vmatprep.subr.mxu0 0.0
    %270 = vmatpush1.msra.mxu0 %v17
    %271 = vmatprep.subr.mxu0 0.0
    %272 = vmatpush1.msra.mxu0 %v18
    %273 = vmatprep.subr.mxu0 0.0
    %274 = vmatpush1.msra.mxu0 %v19
    %275 = vmatprep.subr.mxu0 0.0
    %276 = vmatpush1.msra.mxu0 %v20
    %277 = vmatprep.subr.mxu0 0.0
    %278 = vmatpush1.msra.mxu0 0.0
    %279 = vmatprep.subr.mxu0 0.0
    %280 = vmatpush1.msra.mxu0 0.0
    %281 = vmatprep.subr.mxu0 0.0
    %282 = vmatpush1.msra.mxu0 0.0
    %283 = vmatprep.subr.mxu0 0.0
    %284 = vmatpush1.msra.mxu0 0.0
    %285 = vmatprep.subr.mxu0 0.0
    %286 = vmatpush1.msra.mxu0 0.0
    %287 = vmatprep.subr.mxu0 0.0
    %288 = vmatpush1.msra.mxu0 0.0
    %289 = vmatprep.subr.mxu0 0.0
    %290 = vmatpush1.msra.mxu0 0.0
    %291 = vmatprep.subr.mxu0 0.0
    %292 = vmatpush1.msra.mxu0 0.0
    %293 = vmatprep.subr.mxu0 0.0
    %294 = vmatpush1.msra.mxu0 0.0
    %295 = vmatprep.subr.mxu0 0.0
    %296 = vmatpush1.msra.mxu0 0.0
    %297 = vmatprep.subr.mxu0 0.0
    %298 = vmatpush1.msra.mxu0 0.0
    %299 = vmatprep.subr.mxu0 0.0
    %300 = vmatpush1.msra.mxu0 0.0
    %301 = vmatprep.subr.mxu0 0.0
    %302 = vmatpush1.msra.mxu0 0.0
    %303 = vmatprep.subr.mxu0 0.0
    %304 = vmatpush1.msra.mxu0 0.0
    %305 = vmatprep.subr.mxu0 0.0
    %306 = vmatpush1.msra.mxu0 0.0
    %307 = vmatprep.subr.mxu0 0.0
    %308 = vmatpush1.msra.mxu0 0.0
    %309 = vmatprep.subr.mxu0 0.0
    %310 = vmatpush1.msra.mxu0 0.0
    %311 = vmatprep.subr.mxu0 0.0
    %312 = vmatpush1.msra.mxu0 0.0
    %313 = vmatprep.subr.mxu0 0.0
    %314 = vmatpush1.msra.mxu0 0.0
    %315 = vmatprep.subr.mxu0 0.0
    %316 = vmatpush1.msra.mxu0 0.0
    %317 = vmatprep.subr.mxu0 0.0
    %318 = vmatpush1.msra.mxu0 0.0
    %319 = vmatprep.subr.mxu0 0.0
    %320 = vmatpush1.msra.mxu0 0.0
    %321 = vmatprep.subr.mxu0 0.0
    %322 = vmatpush1.msra.mxu0 0.0
    %323 = vmatprep.subr.mxu0 0.0
    %324 = vmatpush1.msra.mxu0 0.0
    %325 = vmatprep.subr.mxu0 0.0
    %326 = vmatpush1.msra.mxu0 0.0
    %327 = vmatprep.subr.mxu0 0.0
    %328 = vmatpush1.msra.mxu0 0.0
    %329 = vmatprep.subr.mxu0 0.0
    %330 = vmatpush1.msra.mxu0 0.0
    %331 = vmatprep.subr.mxu0 0.0
    %332 = vmatpush1.msra.mxu0 0.0
    %333 = vmatprep.mubr.f32.mxu0 0.0
    %334 = vmatmul.mubr.f32.gmra.mrb[0].mxu0 %v267
    %v335 = vpop.f32.mrb[0].mxu0
    %v336 = vadd.f32 0.0, %v335
    %v337 = vpop.f32.mrb[0].mxu0
    %338 = vdwg.mxu0
    %v340 = vrot.slane %v336, 5
    %v342 = vadd.f32 %v103, %v340
    %v343 = vtanh.pop %v342
    %v345 = vrot.slane %v343, 3
    %v346 = vsel %vm107, %v345, 0
    %348 = vmatprep.subr.mxu0 0.0
    %349 = vmatpush1.msra.mxu0 %v17
    %350 = vmatprep.subr.mxu0 0.0
    %351 = vmatpush1.msra.mxu0 %v18
    %352 = vmatprep.subr.mxu0 0.0
    %353 = vmatpush1.msra.mxu0 %v19
    %354 = vmatprep.subr.mxu0 0.0
    %355 = vmatpush1.msra.mxu0 %v20
    %356 = vmatprep.subr.mxu0 0.0
    %357 = vmatpush1.msra.mxu0 0.0
    %358 = vmatprep.subr.mxu0 0.0
    %359 = vmatpush1.msra.mxu0 0.0
    %360 = vmatprep.subr.mxu0 0.0
    %361 = vmatpush1.msra.mxu0 0.0
    %362 = vmatprep.subr.mxu0 0.0
    %363 = vmatpush1.msra.mxu0 0.0
    %364 = vmatprep.subr.mxu0 0.0
    %365 = vmatpush1.msra.mxu0 0.0
    %366 = vmatprep.subr.mxu0 0.0
    %367 = vmatpush1.msra.mxu0 0.0
    %368 = vmatprep.subr.mxu0 0.0
    %369 = vmatpush1.msra.mxu0 0.0
    %370 = vmatprep.subr.mxu0 0.0
    %371 = vmatpush1.msra.mxu0 0.0
    %372 = vmatprep.subr.mxu0 0.0
    %373 = vmatpush1.msra.mxu0 0.0
    %374 = vmatprep.subr.mxu0 0.0
    %375 = vmatpush1.msra.mxu0 0.0
    %376 = vmatprep.subr.mxu0 0.0
    %377 = vmatpush1.msra.mxu0 0.0
    %378 = vmatprep.subr.mxu0 0.0
    %379 = vmatpush1.msra.mxu0 0.0
    %380 = vmatprep.subr.mxu0 0.0
    %381 = vmatpush1.msra.mxu0 0.0
    %382 = vmatprep.subr.mxu0 0.0
    %383 = vmatpush1.msra.mxu0 0.0
    %384 = vmatprep.subr.mxu0 0.0
    %385 = vmatpush1.msra.mxu0 0.0
    %386 = vmatprep.subr.mxu0 0.0
    %387 = vmatpush1.msra.mxu0 0.0
    %388 = vmatprep.subr.mxu0 0.0
    %389 = vmatpush1.msra.mxu0 0.0
    %390 = vmatprep.subr.mxu0 0.0
    %391 = vmatpush1.msra.mxu0 0.0
    %392 = vmatprep.subr.mxu0 0.0
    %393 = vmatpush1.msra.mxu0 0.0
    %394 = vmatprep.subr.mxu0 0.0
    %395 = vmatpush1.msra.mxu0 0.0
    %396 = vmatprep.subr.mxu0 0.0
    %397 = vmatpush1.msra.mxu0 0.0
    %398 = vmatprep.subr.mxu0 0.0
    %399 = vmatpush1.msra.mxu0 0.0
    %400 = vmatprep.subr.mxu0 0.0
    %401 = vmatpush1.msra.mxu0 0.0
    %402 = vmatprep.subr.mxu0 0.0
    %403 = vmatpush1.msra.mxu0 0.0
    %404 = vmatprep.subr.mxu0 0.0
    %405 = vmatpush1.msra.mxu0 0.0
    %406 = vmatprep.subr.mxu0 0.0
    %407 = vmatpush1.msra.mxu0 0.0
    %408 = vmatprep.subr.mxu0 0.0
    %409 = vmatpush1.msra.mxu0 0.0
    %410 = vmatprep.subr.mxu0 0.0
    %411 = vmatpush1.msra.mxu0 0.0
    %412 = vmatprep.mubr.f32.mxu0 0.0
    %413 = vmatmul.mubr.f32.gmra.mrb[0].mxu0 %v346
    %v414 = vpop.f32.mrb[0].mxu0
    %v415 = vadd.f32 0.0, %v414
    %v416 = vpop.f32.mrb[0].mxu0
    %417 = vdwg.mxu0
    %v419 = vrot.slane %v415, 4
    %v421 = vadd.f32 %v103, %v419
    %v422 = vtanh.pop %v421
    %v424 = vrot.slane %v422, 4
    %v425 = vsel %vm107, %v424, 0
    %427 = vmatprep.subr.mxu0 0.0
    %428 = vmatpush1.msra.mxu0 %v17
    %429 = vmatprep.subr.mxu0 0.0
    %430 = vmatpush1.msra.mxu0 %v18
    %431 = vmatprep.subr.mxu0 0.0
    %432 = vmatpush1.msra.mxu0 %v19
    %433 = vmatprep.subr.mxu0 0.0
    %434 = vmatpush1.msra.mxu0 %v20
    %435 = vmatprep.subr.mxu0 0.0
    %436 = vmatpush1.msra.mxu0 0.0
    %437 = vmatprep.subr.mxu0 0.0
    %438 = vmatpush1.msra.mxu0 0.0
    %439 = vmatprep.subr.mxu0 0.0
    %440 = vmatpush1.msra.mxu0 0.0
    %441 = vmatprep.subr.mxu0 0.0
    %442 = vmatpush1.msra.mxu0 0.0
    %443 = vmatprep.subr.mxu0 0.0
    %444 = vmatpush1.msra.mxu0 0.0
    %445 = vmatprep.subr.mxu0 0.0
    %446 = vmatpush1.msra.mxu0 0.0
    %447 = vmatprep.subr.mxu0 0.0
    %448 = vmatpush1.msra.mxu0 0.0
    %449 = vmatprep.subr.mxu0 0.0
    %450 = vmatpush1.msra.mxu0 0.0
    %451 = vmatprep.subr.mxu0 0.0
    %452 = vmatpush1.msra.mxu0 0.0
    %453 = vmatprep.subr.mxu0 0.0
    %454 = vmatpush1.msra.mxu0 0.0
    %455 = vmatprep.subr.mxu0 0.0
    %456 = vmatpush1.msra.mxu0 0.0
    %457 = vmatprep.subr.mxu0 0.0
    %458 = vmatpush1.msra.mxu0 0.0
    %459 = vmatprep.subr.mxu0 0.0
    %460 = vmatpush1.msra.mxu0 0.0
    %461 = vmatprep.subr.mxu0 0.0
    %462 = vmatpush1.msra.mxu0 0.0
    %463 = vmatprep.subr.mxu0 0.0
    %464 = vmatpush1.msra.mxu0 0.0
    %465 = vmatprep.subr.mxu0 0.0
    %466 = vmatpush1.msra.mxu0 0.0
    %467 = vmatprep.subr.mxu0 0.0
    %468 = vmatpush1.msra.mxu0 0.0
    %469 = vmatprep.subr.mxu0 0.0
    %470 = vmatpush1.msra.mxu0 0.0
    %471 = vmatprep.subr.mxu0 0.0
    %472 = vmatpush1.msra.mxu0 0.0
    %473 = vmatprep.subr.mxu0 0.0
    %474 = vmatpush1.msra.mxu0 0.0
    %475 = vmatprep.subr.mxu0 0.0
    %476 = vmatpush1.msra.mxu0 0.0
    %477 = vmatprep.subr.mxu0 0.0
    %478 = vmatpush1.msra.mxu0 0.0
    %479 = vmatprep.subr.mxu0 0.0
    %480 = vmatpush1.msra.mxu0 0.0
    %481 = vmatprep.subr.mxu0 0.0
    %482 = vmatpush1.msra.mxu0 0.0
    %483 = vmatprep.subr.mxu0 0.0
    %484 = vmatpush1.msra.mxu0 0.0
    %485 = vmatprep.subr.mxu0 0.0
    %486 = vmatpush1.msra.mxu0 0.0
    %487 = vmatprep.subr.mxu0 0.0
    %488 = vmatpush1.msra.mxu0 0.0
    %489 = vmatprep.subr.mxu0 0.0
    %490 = vmatpush1.msra.mxu0 0.0
    %491 = vmatprep.mubr.f32.mxu0 0.0
    %492 = vmatmul.mubr.f32.gmra.mrb[0].mxu0 %v425
    %v493 = vpop.f32.mrb[0].mxu0
    %v494 = vadd.f32 0.0, %v493
    %v495 = vpop.f32.mrb[0].mxu0
    %496 = vdwg.mxu0
    %v498 = vrot.slane %v494, 3
    %v500 = vadd.f32 %v103, %v498
    %v501 = vtanh.pop %v500
    %v503 = vrot.slane %v501, 5
    %v504 = vsel %vm107, %v503, 0
    %506 = vmatprep.subr.mxu0 0.0
    %507 = vmatpush1.msra.mxu0 %v17
    %508 = vmatprep.subr.mxu0 0.0
    %509 = vmatpush1.msra.mxu0 %v18
    %510 = vmatprep.subr.mxu0 0.0
    %511 = vmatpush1.msra.mxu0 %v19
    %512 = vmatprep.subr.mxu0 0.0
    %513 = vmatpush1.msra.mxu0 %v20
    %514 = vmatprep.subr.mxu0 0.0
    %515 = vmatpush1.msra.mxu0 0.0
    %516 = vmatprep.subr.mxu0 0.0
    %517 = vmatpush1.msra.mxu0 0.0
    %518 = vmatprep.subr.mxu0 0.0
    %519 = vmatpush1.msra.mxu0 0.0
    %520 = vmatprep.subr.mxu0 0.0
    %521 = vmatpush1.msra.mxu0 0.0
    %522 = vmatprep.subr.mxu0 0.0
    %523 = vmatpush1.msra.mxu0 0.0
    %524 = vmatprep.subr.mxu0 0.0
    %525 = vmatpush1.msra.mxu0 0.0
    %526 = vmatprep.subr.mxu0 0.0
    %527 = vmatpush1.msra.mxu0 0.0
    %528 = vmatprep.subr.mxu0 0.0
    %529 = vmatpush1.msra.mxu0 0.0
    %530 = vmatprep.subr.mxu0 0.0
    %531 = vmatpush1.msra.mxu0 0.0
    %532 = vmatprep.subr.mxu0 0.0
    %533 = vmatpush1.msra.mxu0 0.0
    %534 = vmatprep.subr.mxu0 0.0
    %535 = vmatpush1.msra.mxu0 0.0
    %536 = vmatprep.subr.mxu0 0.0
    %537 = vmatpush1.msra.mxu0 0.0
    %538 = vmatprep.subr.mxu0 0.0
    %539 = vmatpush1.msra.mxu0 0.0
    %540 = vmatprep.subr.mxu0 0.0
    %541 = vmatpush1.msra.mxu0 0.0
    %542 = vmatprep.subr.mxu0 0.0
    %543 = vmatpush1.msra.mxu0 0.0
    %544 = vmatprep.subr.mxu0 0.0
    %545 = vmatpush1.msra.mxu0 0.0
    %546 = vmatprep.subr.mxu0 0.0
    %547 = vmatpush1.msra.mxu0 0.0
    %548 = vmatprep.subr.mxu0 0.0
    %549 = vmatpush1.msra.mxu0 0.0
    %550 = vmatprep.subr.mxu0 0.0
    %551 = vmatpush1.msra.mxu0 0.0
    %552 = vmatprep.subr.mxu0 0.0
    %553 = vmatpush1.msra.mxu0 0.0
    %554 = vmatprep.subr.mxu0 0.0
    %555 = vmatpush1.msra.mxu0 0.0
    %556 = vmatprep.subr.mxu0 0.0
    %557 = vmatpush1.msra.mxu0 0.0
    %558 = vmatprep.subr.mxu0 0.0
    %559 = vmatpush1.msra.mxu0 0.0
    %560 = vmatprep.subr.mxu0 0.0
    %561 = vmatpush1.msra.mxu0 0.0
    %562 = vmatprep.subr.mxu0 0.0
    %563 = vmatpush1.msra.mxu0 0.0
    %564 = vmatprep.subr.mxu0 0.0
    %565 = vmatpush1.msra.mxu0 0.0
    %566 = vmatprep.subr.mxu0 0.0
    %567 = vmatpush1.msra.mxu0 0.0
    %568 = vmatprep.subr.mxu0 0.0
    %569 = vmatpush1.msra.mxu0 0.0
    %570 = vmatprep.mubr.f32.mxu0 0.0
    %571 = vmatmul.mubr.f32.gmra.mrb[0].mxu0 %v504
    %v572 = vpop.f32.mrb[0].mxu0
    %v573 = vadd.f32 0.0, %v572
    %v574 = vpop.f32.mrb[0].mxu0
    %575 = vdwg.mxu0
    %v577 = vrot.slane %v573, 2
    %v579 = vadd.f32 %v103, %v577
    %v580 = vtanh.pop %v579
    %v582 = vrot.slane %v580, 6
    %v583 = vsel %vm107, %v582, 0
    %585 = vmatprep.subr.mxu0 0.0
    %586 = vmatpush1.msra.mxu0 %v17
    %587 = vmatprep.subr.mxu0 0.0
    %588 = vmatpush1.msra.mxu0 %v18
    %589 = vmatprep.subr.mxu0 0.0
    %590 = vmatpush1.msra.mxu0 %v19
    %591 = vmatprep.subr.mxu0 0.0
    %592 = vmatpush1.msra.mxu0 %v20
    %593 = vmatprep.subr.mxu0 0.0
    %594 = vmatpush1.msra.mxu0 0.0
    %595 = vmatprep.subr.mxu0 0.0
    %596 = vmatpush1.msra.mxu0 0.0
    %597 = vmatprep.subr.mxu0 0.0
    %598 = vmatpush1.msra.mxu0 0.0
    %599 = vmatprep.subr.mxu0 0.0
    %600 = vmatpush1.msra.mxu0 0.0
    %601 = vmatprep.subr.mxu0 0.0
    %602 = vmatpush1.msra.mxu0 0.0
    %603 = vmatprep.subr.mxu0 0.0
    %604 = vmatpush1.msra.mxu0 0.0
    %605 = vmatprep.subr.mxu0 0.0
    %606 = vmatpush1.msra.mxu0 0.0
    %607 = vmatprep.subr.mxu0 0.0
    %608 = vmatpush1.msra.mxu0 0.0
    %609 = vmatprep.subr.mxu0 0.0
    %610 = vmatpush1.msra.mxu0 0.0
    %611 = vmatprep.subr.mxu0 0.0
    %612 = vmatpush1.msra.mxu0 0.0
    %613 = vmatprep.subr.mxu0 0.0
    %614 = vmatpush1.msra.mxu0 0.0
    %615 = vmatprep.subr.mxu0 0.0
    %616 = vmatpush1.msra.mxu0 0.0
    %617 = vmatprep.subr.mxu0 0.0
    %618 = vmatpush1.msra.mxu0 0.0
    %619 = vmatprep.subr.mxu0 0.0
    %620 = vmatpush1.msra.mxu0 0.0
    %621 = vmatprep.subr.mxu0 0.0
    %622 = vmatpush1.msra.mxu0 0.0
    %623 = vmatprep.subr.mxu0 0.0
    %624 = vmatpush1.msra.mxu0 0.0
    %625 = vmatprep.subr.mxu0 0.0
    %626 = vmatpush1.msra.mxu0 0.0
    %627 = vmatprep.subr.mxu0 0.0
    %628 = vmatpush1.msra.mxu0 0.0
    %629 = vmatprep.subr.mxu0 0.0
    %630 = vmatpush1.msra.mxu0 0.0
    %631 = vmatprep.subr.mxu0 0.0
    %632 = vmatpush1.msra.mxu0 0.0
    %633 = vmatprep.subr.mxu0 0.0
    %634 = vmatpush1.msra.mxu0 0.0
    %635 = vmatprep.subr.mxu0 0.0
    %636 = vmatpush1.msra.mxu0 0.0
    %637 = vmatprep.subr.mxu0 0.0
    %638 = vmatpush1.msra.mxu0 0.0
    %639 = vmatprep.subr.mxu0 0.0
    %640 = vmatpush1.msra.mxu0 0.0
    %641 = vmatprep.subr.mxu0 0.0
    %642 = vmatpush1.msra.mxu0 0.0
    %643 = vmatprep.subr.mxu0 0.0
    %644 = vmatpush1.msra.mxu0 0.0
    %645 = vmatprep.subr.mxu0 0.0
    %646 = vmatpush1.msra.mxu0 0.0
    %647 = vmatprep.subr.mxu0 0.0
    %648 = vmatpush1.msra.mxu0 0.0
    %649 = vmatprep.mubr.f32.mxu0 0.0
    %650 = vmatmul.mubr.f32.gmra.mrb[0].mxu0 %v583
    %v651 = vpop.f32.mrb[0].mxu0
    %v652 = vadd.f32 0.0, %v651
    %v653 = vpop.f32.mrb[0].mxu0
    %654 = vdwg.mxu0
    %v656 = vrot.slane %v652, 1
    %v658 = vadd.f32 %v103, %v656
    %v659 = vtanh.pop %v658
    %s660 = scalar_lea.vmem %s0, 8
    %v661 = vld [vmem:[%s660] sm:$0xff]
    %v663 = vsel %vm32, %v661, 0
    %665 = vmatprep.subr.mxu0 0.0
    %666 = vmatpush1.msra.mxu0 %v15
    %667 = vmatprep.subr.mxu0 0.0
    %668 = vmatpush1.msra.mxu0 %v16
    %669 = vmatprep.subr.mxu0 0.0
    %670 = vmatpush1.msra.mxu0 0.0
    %671 = vmatprep.subr.mxu0 0.0
    %672 = vmatpush1.msra.mxu0 0.0
    %673 = vmatprep.subr.mxu0 0.0
    %674 = vmatpush1.msra.mxu0 0.0
    %675 = vmatprep.subr.mxu0 0.0
    %676 = vmatpush1.msra.mxu0 0.0
    %677 = vmatprep.subr.mxu0 0.0
    %678 = vmatpush1.msra.mxu0 0.0
    %679 = vmatprep.subr.mxu0 0.0
    %680 = vmatpush1.msra.mxu0 0.0
    %681 = vmatprep.subr.mxu0 0.0
    %682 = vmatpush1.msra.mxu0 0.0
    %683 = vmatprep.subr.mxu0 0.0
    %684 = vmatpush1.msra.mxu0 0.0
    %685 = vmatprep.subr.mxu0 0.0
    %686 = vmatpush1.msra.mxu0 0.0
    %687 = vmatprep.subr.mxu0 0.0
    %688 = vmatpush1.msra.mxu0 0.0
    %689 = vmatprep.subr.mxu0 0.0
    %690 = vmatpush1.msra.mxu0 0.0
    %691 = vmatprep.subr.mxu0 0.0
    %692 = vmatpush1.msra.mxu0 0.0
    %693 = vmatprep.subr.mxu0 0.0
    %694 = vmatpush1.msra.mxu0 0.0
    %695 = vmatprep.subr.mxu0 0.0
    %696 = vmatpush1.msra.mxu0 0.0
    %697 = vmatprep.subr.mxu0 0.0
    %698 = vmatpush1.msra.mxu0 0.0
    %699 = vmatprep.subr.mxu0 0.0
    %700 = vmatpush1.msra.mxu0 0.0
    %701 = vmatprep.subr.mxu0 0.0
    %702 = vmatpush1.msra.mxu0 0.0
    %703 = vmatprep.subr.mxu0 0.0
    %704 = vmatpush1.msra.mxu0 0.0
    %705 = vmatprep.subr.mxu0 0.0
    %706 = vmatpush1.msra.mxu0 0.0
    %707 = vmatprep.subr.mxu0 0.0
    %708 = vmatpush1.msra.mxu0 0.0
    %709 = vmatprep.subr.mxu0 0.0
    %710 = vmatpush1.msra.mxu0 0.0
    %711 = vmatprep.subr.mxu0 0.0
    %712 = vmatpush1.msra.mxu0 0.0
    %713 = vmatprep.subr.mxu0 0.0
    %714 = vmatpush1.msra.mxu0 0.0
    %715 = vmatprep.subr.mxu0 0.0
    %716 = vmatpush1.msra.mxu0 0.0
    %717 = vmatprep.subr.mxu0 0.0
    %718 = vmatpush1.msra.mxu0 0.0
    %719 = vmatprep.subr.mxu0 0.0
    %720 = vmatpush1.msra.mxu0 0.0
    %721 = vmatprep.subr.mxu0 0.0
    %722 = vmatpush1.msra.mxu0 0.0
    %723 = vmatprep.subr.mxu0 0.0
    %724 = vmatpush1.msra.mxu0 0.0
    %725 = vmatprep.subr.mxu0 0.0
    %726 = vmatpush1.msra.mxu0 0.0
    %727 = vmatprep.subr.mxu0 0.0
    %728 = vmatpush1.msra.mxu0 0.0
    %729 = vmatprep.mubr.f32.mxu0 0.0
    %730 = vmatmul.mubr.f32.gmra.mrb[0].mxu0 %v663
    %v731 = vpop.f32.mrb[0].mxu0
    %v732 = vadd.f32 %v31, %v731
    %v733 = vpop.f32.mrb[0].mxu0
    %734 = vdwg.mxu0
    %v735 = vtanh.pop %v732
    %v737 = vsel %vm107, %v735, 0
    %739 = vmatprep.subr.mxu0 0.0
    %740 = vmatpush1.msra.mxu0 %v17
    %741 = vmatprep.subr.mxu0 0.0
    %742 = vmatpush1.msra.mxu0 %v18
    %743 = vmatprep.subr.mxu0 0.0
    %744 = vmatpush1.msra.mxu0 %v19
    %745 = vmatprep.subr.mxu0 0.0
    %746 = vmatpush1.msra.mxu0 %v20
    %747 = vmatprep.subr.mxu0 0.0
    %748 = vmatpush1.msra.mxu0 0.0
    %749 = vmatprep.subr.mxu0 0.0
    %750 = vmatpush1.msra.mxu0 0.0
    %751 = vmatprep.subr.mxu0 0.0
    %752 = vmatpush1.msra.mxu0 0.0
    %753 = vmatprep.subr.mxu0 0.0
    %754 = vmatpush1.msra.mxu0 0.0
    %755 = vmatprep.subr.mxu0 0.0
    %756 = vmatpush1.msra.mxu0 0.0
    %757 = vmatprep.subr.mxu0 0.0
    %758 = vmatpush1.msra.mxu0 0.0
    %759 = vmatprep.subr.mxu0 0.0
    %760 = vmatpush1.msra.mxu0 0.0
    %761 = vmatprep.subr.mxu0 0.0
    %762 = vmatpush1.msra.mxu0 0.0
    %763 = vmatprep.subr.mxu0 0.0
    %764 = vmatpush1.msra.mxu0 0.0
    %765 = vmatprep.subr.mxu0 0.0
    %766 = vmatpush1.msra.mxu0 0.0
    %767 = vmatprep.subr.mxu0 0.0
    %768 = vmatpush1.msra.mxu0 0.0
    %769 = vmatprep.subr.mxu0 0.0
    %770 = vmatpush1.msra.mxu0 0.0
    %771 = vmatprep.subr.mxu0 0.0
    %772 = vmatpush1.msra.mxu0 0.0
    %773 = vmatprep.subr.mxu0 0.0
    %774 = vmatpush1.msra.mxu0 0.0
    %775 = vmatprep.subr.mxu0 0.0
    %776 = vmatpush1.msra.mxu0 0.0
    %777 = vmatprep.subr.mxu0 0.0
    %778 = vmatpush1.msra.mxu0 0.0
    %779 = vmatprep.subr.mxu0 0.0
    %780 = vmatpush1.msra.mxu0 0.0
    %781 = vmatprep.subr.mxu0 0.0
    %782 = vmatpush1.msra.mxu0 0.0
    %783 = vmatprep.subr.mxu0 0.0
    %784 = vmatpush1.msra.mxu0 0.0
    %785 = vmatprep.subr.mxu0 0.0
    %786 = vmatpush1.msra.mxu0 0.0
    %787 = vmatprep.subr.mxu0 0.0
    %788 = vmatpush1.msra.mxu0 0.0
    %789 = vmatprep.subr.mxu0 0.0
    %790 = vmatpush1.msra.mxu0 0.0
    %791 = vmatprep.subr.mxu0 0.0
    %792 = vmatpush1.msra.mxu0 0.0
    %793 = vmatprep.subr.mxu0 0.0
    %794 = vmatpush1.msra.mxu0 0.0
    %795 = vmatprep.subr.mxu0 0.0
    %796 = vmatpush1.msra.mxu0 0.0
    %797 = vmatprep.subr.mxu0 0.0
    %798 = vmatpush1.msra.mxu0 0.0
    %799 = vmatprep.subr.mxu0 0.0
    %800 = vmatpush1.msra.mxu0 0.0
    %801 = vmatprep.subr.mxu0 0.0
    %802 = vmatpush1.msra.mxu0 0.0
    %803 = vmatprep.mubr.f32.mxu0 0.0
    %804 = vmatmul.mubr.f32.gmra.mrb[0].mxu0 %v737
    %v805 = vpop.f32.mrb[0].mxu0
    %v806 = vadd.f32 0.0, %v805
    %v807 = vpop.f32.mrb[0].mxu0
    %808 = vdwg.mxu0
    %v810 = vrot.slane %v806, 7
    %v812 = vadd.f32 %v732, %v810
    %v813 = vtanh.pop %v812
    %v815 = vrot.slane %v813, 1
    %v816 = vsel %vm107, %v815, 0
    %818 = vmatprep.subr.mxu0 0.0
    %819 = vmatpush1.msra.mxu0 %v17
    %820 = vmatprep.subr.mxu0 0.0
    %821 = vmatpush1.msra.mxu0 %v18
    %822 = vmatprep.subr.mxu0 0.0
    %823 = vmatpush1.msra.mxu0 %v19
    %824 = vmatprep.subr.mxu0 0.0
    %825 = vmatpush1.msra.mxu0 %v20
    %826 = vmatprep.subr.mxu0 0.0
    %827 = vmatpush1.msra.mxu0 0.0
    %828 = vmatprep.subr.mxu0 0.0
    %829 = vmatpush1.msra.mxu0 0.0
    %830 = vmatprep.subr.mxu0 0.0
    %831 = vmatpush1.msra.mxu0 0.0
    %832 = vmatprep.subr.mxu0 0.0
    %833 = vmatpush1.msra.mxu0 0.0
    %834 = vmatprep.subr.mxu0 0.0
    %835 = vmatpush1.msra.mxu0 0.0
    %836 = vmatprep.subr.mxu0 0.0
    %837 = vmatpush1.msra.mxu0 0.0
    %838 = vmatprep.subr.mxu0 0.0
    %839 = vmatpush1.msra.mxu0 0.0
    %840 = vmatprep.subr.mxu0 0.0
    %841 = vmatpush1.msra.mxu0 0.0
    %842 = vmatprep.subr.mxu0 0.0
    %843 = vmatpush1.msra.mxu0 0.0
    %844 = vmatprep.subr.mxu0 0.0
    %845 = vmatpush1.msra.mxu0 0.0
    %846 = vmatprep.subr.mxu0 0.0
    %847 = vmatpush1.msra.mxu0 0.0
    %848 = vmatprep.subr.mxu0 0.0
    %849 = vmatpush1.msra.mxu0 0.0
    %850 = vmatprep.subr.mxu0 0.0
    %851 = vmatpush1.msra.mxu0 0.0
    %852 = vmatprep.subr.mxu0 0.0
    %853 = vmatpush1.msra.mxu0 0.0
    %854 = vmatprep.subr.mxu0 0.0
    %855 = vmatpush1.msra.mxu0 0.0
    %856 = vmatprep.subr.mxu0 0.0
    %857 = vmatpush1.msra.mxu0 0.0
    %858 = vmatprep.subr.mxu0 0.0
    %859 = vmatpush1.msra.mxu0 0.0
    %860 = vmatprep.subr.mxu0 0.0
    %861 = vmatpush1.msra.mxu0 0.0
    %862 = vmatprep.subr.mxu0 0.0
    %863 = vmatpush1.msra.mxu0 0.0
    %864 = vmatprep.subr.mxu0 0.0
    %865 = vmatpush1.msra.mxu0 0.0
    %866 = vmatprep.subr.mxu0 0.0
    %867 = vmatpush1.msra.mxu0 0.0
    %868 = vmatprep.subr.mxu0 0.0
    %869 = vmatpush1.msra.mxu0 0.0
    %870 = vmatprep.subr.mxu0 0.0
    %871 = vmatpush1.msra.mxu0 0.0
    %872 = vmatprep.subr.mxu0 0.0
    %873 = vmatpush1.msra.mxu0 0.0
    %874 = vmatprep.subr.mxu0 0.0
    %875 = vmatpush1.msra.mxu0 0.0
    %876 = vmatprep.subr.mxu0 0.0
    %877 = vmatpush1.msra.mxu0 0.0
    %878 = vmatprep.subr.mxu0 0.0
    %879 = vmatpush1.msra.mxu0 0.0
    %880 = vmatprep.subr.mxu0 0.0
    %881 = vmatpush1.msra.mxu0 0.0
    %882 = vmatprep.mubr.f32.mxu0 0.0
    %883 = vmatmul.mubr.f32.gmra.mrb[0].mxu0 %v816
    %v884 = vpop.f32.mrb[0].mxu0
    %v885 = vadd.f32 0.0, %v884
    %v886 = vpop.f32.mrb[0].mxu0
    %887 = vdwg.mxu0
    %v889 = vrot.slane %v885, 6
    %v891 = vadd.f32 %v732, %v889
    %v892 = vtanh.pop %v891
    %v894 = vrot.slane %v892, 2
    %v895 = vsel %vm107, %v894, 0
    %897 = vmatprep.subr.mxu0 0.0
    %898 = vmatpush1.msra.mxu0 %v17
    %899 = vmatprep.subr.mxu0 0.0
    %900 = vmatpush1.msra.mxu0 %v18
    %901 = vmatprep.subr.mxu0 0.0
    %902 = vmatpush1.msra.mxu0 %v19
    %903 = vmatprep.subr.mxu0 0.0
    %904 = vmatpush1.msra.mxu0 %v20
    %905 = vmatprep.subr.mxu0 0.0
    %906 = vmatpush1.msra.mxu0 0.0
    %907 = vmatprep.subr.mxu0 0.0
    %908 = vmatpush1.msra.mxu0 0.0
    %909 = vmatprep.subr.mxu0 0.0
    %910 = vmatpush1.msra.mxu0 0.0
    %911 = vmatprep.subr.mxu0 0.0
    %912 = vmatpush1.msra.mxu0 0.0
    %913 = vmatprep.subr.mxu0 0.0
    %914 = vmatpush1.msra.mxu0 0.0
    %915 = vmatprep.subr.mxu0 0.0
    %916 = vmatpush1.msra.mxu0 0.0
    %917 = vmatprep.subr.mxu0 0.0
    %918 = vmatpush1.msra.mxu0 0.0
    %919 = vmatprep.subr.mxu0 0.0
    %920 = vmatpush1.msra.mxu0 0.0
    %921 = vmatprep.subr.mxu0 0.0
    %922 = vmatpush1.msra.mxu0 0.0
    %923 = vmatprep.subr.mxu0 0.0
    %924 = vmatpush1.msra.mxu0 0.0
    %925 = vmatprep.subr.mxu0 0.0
    %926 = vmatpush1.msra.mxu0 0.0
    %927 = vmatprep.subr.mxu0 0.0
    %928 = vmatpush1.msra.mxu0 0.0
    %929 = vmatprep.subr.mxu0 0.0
    %930 = vmatpush1.msra.mxu0 0.0
    %931 = vmatprep.subr.mxu0 0.0
    %932 = vmatpush1.msra.mxu0 0.0
    %933 = vmatprep.subr.mxu0 0.0
    %934 = vmatpush1.msra.mxu0 0.0
    %935 = vmatprep.subr.mxu0 0.0
    %936 = vmatpush1.msra.mxu0 0.0
    %937 = vmatprep.subr.mxu0 0.0
    %938 = vmatpush1.msra.mxu0 0.0
    %939 = vmatprep.subr.mxu0 0.0
    %940 = vmatpush1.msra.mxu0 0.0
    %941 = vmatprep.subr.mxu0 0.0
    %942 = vmatpush1.msra.mxu0 0.0
    %943 = vmatprep.subr.mxu0 0.0
    %944 = vmatpush1.msra.mxu0 0.0
    %945 = vmatprep.subr.mxu0 0.0
    %946 = vmatpush1.msra.mxu0 0.0
    %947 = vmatprep.subr.mxu0 0.0
    %948 = vmatpush1.msra.mxu0 0.0
    %949 = vmatprep.subr.mxu0 0.0
    %950 = vmatpush1.msra.mxu0 0.0
    %951 = vmatprep.subr.mxu0 0.0
    %952 = vmatpush1.msra.mxu0 0.0
    %953 = vmatprep.subr.mxu0 0.0
    %954 = vmatpush1.msra.mxu0 0.0
    %955 = vmatprep.subr.mxu0 0.0
    %956 = vmatpush1.msra.mxu0 0.0
    %957 = vmatprep.subr.mxu0 0.0
    %958 = vmatpush1.msra.mxu0 0.0
    %959 = vmatprep.subr.mxu0 0.0
    %960 = vmatpush1.msra.mxu0 0.0
    %961 = vmatprep.mubr.f32.mxu0 0.0
    %962 = vmatmul.mubr.f32.gmra.mrb[0].mxu0 %v895
    %v963 = vpop.f32.mrb[0].mxu0
    %v964 = vadd.f32 0.0, %v963
    %v965 = vpop.f32.mrb[0].mxu0
    %966 = vdwg.mxu0
    %v968 = vrot.slane %v964, 5
    %v970 = vadd.f32 %v732, %v968
    %v971 = vtanh.pop %v970
    %v973 = vrot.slane %v971, 3
    %v974 = vsel %vm107, %v973, 0
    %976 = vmatprep.subr.mxu0 0.0
    %977 = vmatpush1.msra.mxu0 %v17
    %978 = vmatprep.subr.mxu0 0.0
    %979 = vmatpush1.msra.mxu0 %v18
    %980 = vmatprep.subr.mxu0 0.0
    %981 = vmatpush1.msra.mxu0 %v19
    %982 = vmatprep.subr.mxu0 0.0
    %983 = vmatpush1.msra.mxu0 %v20
    %984 = vmatprep.subr.mxu0 0.0
    %985 = vmatpush1.msra.mxu0 0.0
    %986 = vmatprep.subr.mxu0 0.0
    %987 = vmatpush1.msra.mxu0 0.0
    %988 = vmatprep.subr.mxu0 0.0
    %989 = vmatpush1.msra.mxu0 0.0
    %990 = vmatprep.subr.mxu0 0.0
    %991 = vmatpush1.msra.mxu0 0.0
    %992 = vmatprep.subr.mxu0 0.0
    %993 = vmatpush1.msra.mxu0 0.0
    %994 = vmatprep.subr.mxu0 0.0
    %995 = vmatpush1.msra.mxu0 0.0
    %996 = vmatprep.subr.mxu0 0.0
    %997 = vmatpush1.msra.mxu0 0.0
    %998 = vmatprep.subr.mxu0 0.0
    %999 = vmatpush1.msra.mxu0 0.0
    %1000 = vmatprep.subr.mxu0 0.0
    %1001 = vmatpush1.msra.mxu0 0.0
    %1002 = vmatprep.subr.mxu0 0.0
    %1003 = vmatpush1.msra.mxu0 0.0
    %1004 = vmatprep.subr.mxu0 0.0
    %1005 = vmatpush1.msra.mxu0 0.0
    %1006 = vmatprep.subr.mxu0 0.0
    %1007 = vmatpush1.msra.mxu0 0.0
    %1008 = vmatprep.subr.mxu0 0.0
    %1009 = vmatpush1.msra.mxu0 0.0
    %1010 = vmatprep.subr.mxu0 0.0
    %1011 = vmatpush1.msra.mxu0 0.0
    %1012 = vmatprep.subr.mxu0 0.0
    %1013 = vmatpush1.msra.mxu0 0.0
    %1014 = vmatprep.subr.mxu0 0.0
    %1015 = vmatpush1.msra.mxu0 0.0
    %1016 = vmatprep.subr.mxu0 0.0
    %1017 = vmatpush1.msra.mxu0 0.0
    %1018 = vmatprep.subr.mxu0 0.0
    %1019 = vmatpush1.msra.mxu0 0.0
    %1020 = vmatprep.subr.mxu0 0.0
    %1021 = vmatpush1.msra.mxu0 0.0
    %1022 = vmatprep.subr.mxu0 0.0
    %1023 = vmatpush1.msra.mxu0 0.0
    %1024 = vmatprep.subr.mxu0 0.0
    %1025 = vmatpush1.msra.mxu0 0.0
    %1026 = vmatprep.subr.mxu0 0.0
    %1027 = vmatpush1.msra.mxu0 0.0
    %1028 = vmatprep.subr.mxu0 0.0
    %1029 = vmatpush1.msra.mxu0 0.0
    %1030 = vmatprep.subr.mxu0 0.0
    %1031 = vmatpush1.msra.mxu0 0.0
    %1032 = vmatprep.subr.mxu0 0.0
    %1033 = vmatpush1.msra.mxu0 0.0
    %1034 = vmatprep.subr.mxu0 0.0
    %1035 = vmatpush1.msra.mxu0 0.0
    %1036 = vmatprep.subr.mxu0 0.0
    %1037 = vmatpush1.msra.mxu0 0.0
    %1038 = vmatprep.subr.mxu0 0.0
    %1039 = vmatpush1.msra.mxu0 0.0
    %1040 = vmatprep.mubr.f32.mxu0 0.0
    %1041 = vmatmul.mubr.f32.gmra.mrb[0].mxu0 %v974
    %v1042 = vpop.f32.mrb[0].mxu0
    %v1043 = vadd.f32 0.0, %v1042
    %v1044 = vpop.f32.mrb[0].mxu0
    %1045 = vdwg.mxu0
    %v1047 = vrot.slane %v1043, 4
    %v1049 = vadd.f32 %v732, %v1047
    %v1050 = vtanh.pop %v1049
    %v1052 = vrot.slane %v1050, 4
    %v1053 = vsel %vm107, %v1052, 0
    %1055 = vmatprep.subr.mxu0 0.0
    %1056 = vmatpush1.msra.mxu0 %v17
    %1057 = vmatprep.subr.mxu0 0.0
    %1058 = vmatpush1.msra.mxu0 %v18
    %1059 = vmatprep.subr.mxu0 0.0
    %1060 = vmatpush1.msra.mxu0 %v19
    %1061 = vmatprep.subr.mxu0 0.0
    %1062 = vmatpush1.msra.mxu0 %v20
    %1063 = vmatprep.subr.mxu0 0.0
    %1064 = vmatpush1.msra.mxu0 0.0
    %1065 = vmatprep.subr.mxu0 0.0
    %1066 = vmatpush1.msra.mxu0 0.0
    %1067 = vmatprep.subr.mxu0 0.0
    %1068 = vmatpush1.msra.mxu0 0.0
    %1069 = vmatprep.subr.mxu0 0.0
    %1070 = vmatpush1.msra.mxu0 0.0
    %1071 = vmatprep.subr.mxu0 0.0
    %1072 = vmatpush1.msra.mxu0 0.0
    %1073 = vmatprep.subr.mxu0 0.0
    %1074 = vmatpush1.msra.mxu0 0.0
    %1075 = vmatprep.subr.mxu0 0.0
    %1076 = vmatpush1.msra.mxu0 0.0
    %1077 = vmatprep.subr.mxu0 0.0
    %1078 = vmatpush1.msra.mxu0 0.0
    %1079 = vmatprep.subr.mxu0 0.0
    %1080 = vmatpush1.msra.mxu0 0.0
    %1081 = vmatprep.subr.mxu0 0.0
    %1082 = vmatpush1.msra.mxu0 0.0
    %1083 = vmatprep.subr.mxu0 0.0
    %1084 = vmatpush1.msra.mxu0 0.0
    %1085 = vmatprep.subr.mxu0 0.0
    %1086 = vmatpush1.msra.mxu0 0.0
    %1087 = vmatprep.subr.mxu0 0.0
    %1088 = vmatpush1.msra.mxu0 0.0
    %1089 = vmatprep.subr.mxu0 0.0
    %1090 = vmatpush1.msra.mxu0 0.0
    %1091 = vmatprep.subr.mxu0 0.0
    %1092 = vmatpush1.msra.mxu0 0.0
    %1093 = vmatprep.subr.mxu0 0.0
    %1094 = vmatpush1.msra.mxu0 0.0
    %1095 = vmatprep.subr.mxu0 0.0
    %1096 = vmatpush1.msra.mxu0 0.0
    %1097 = vmatprep.subr.mxu0 0.0
    %1098 = vmatpush1.msra.mxu0 0.0
    %1099 = vmatprep.subr.mxu0 0.0
    %1100 = vmatpush1.msra.mxu0 0.0
    %1101 = vmatprep.subr.mxu0 0.0
    %1102 = vmatpush1.msra.mxu0 0.0
    %1103 = vmatprep.subr.mxu0 0.0
    %1104 = vmatpush1.msra.mxu0 0.0
    %1105 = vmatprep.subr.mxu0 0.0
    %1106 = vmatpush1.msra.mxu0 0.0
    %1107 = vmatprep.subr.mxu0 0.0
    %1108 = vmatpush1.msra.mxu0 0.0
    %1109 = vmatprep.subr.mxu0 0.0
    %1110 = vmatpush1.msra.mxu0 0.0
    %1111 = vmatprep.subr.mxu0 0.0
    %1112 = vmatpush1.msra.mxu0 0.0
    %1113 = vmatprep.subr.mxu0 0.0
    %1114 = vmatpush1.msra.mxu0 0.0
    %1115 = vmatprep.subr.mxu0 0.0
    %1116 = vmatpush1.msra.mxu0 0.0
    %1117 = vmatprep.subr.mxu0 0.0
    %1118 = vmatpush1.msra.mxu0 0.0
    %1119 = vmatprep.mubr.f32.mxu0 0.0
    %1120 = vmatmul.mubr.f32.gmra.mrb[0].mxu0 %v1053
    %v1121 = vpop.f32.mrb[0].mxu0
    %v1122 = vadd.f32 0.0, %v1121
    %v1123 = vpop.f32.mrb[0].mxu0
    %1124 = vdwg.mxu0
    %v1126 = vrot.slane %v1122, 3
    %v1128 = vadd.f32 %v732, %v1126
    %v1129 = vtanh.pop %v1128
    %v1131 = vrot.slane %v1129, 5
    %v1132 = vsel %vm107, %v1131, 0
    %1134 = vmatprep.subr.mxu0 0.0
    %1135 = vmatpush1.msra.mxu0 %v17
    %1136 = vmatprep.subr.mxu0 0.0
    %1137 = vmatpush1.msra.mxu0 %v18
    %1138 = vmatprep.subr.mxu0 0.0
    %1139 = vmatpush1.msra.mxu0 %v19
    %1140 = vmatprep.subr.mxu0 0.0
    %1141 = vmatpush1.msra.mxu0 %v20
    %1142 = vmatprep.subr.mxu0 0.0
    %1143 = vmatpush1.msra.mxu0 0.0
    %1144 = vmatprep.subr.mxu0 0.0
    %1145 = vmatpush1.msra.mxu0 0.0
    %1146 = vmatprep.subr.mxu0 0.0
    %1147 = vmatpush1.msra.mxu0 0.0
    %1148 = vmatprep.subr.mxu0 0.0
    %1149 = vmatpush1.msra.mxu0 0.0
    %1150 = vmatprep.subr.mxu0 0.0
    %1151 = vmatpush1.msra.mxu0 0.0
    %1152 = vmatprep.subr.mxu0 0.0
    %1153 = vmatpush1.msra.mxu0 0.0
    %1154 = vmatprep.subr.mxu0 0.0
    %1155 = vmatpush1.msra.mxu0 0.0
    %1156 = vmatprep.subr.mxu0 0.0
    %1157 = vmatpush1.msra.mxu0 0.0
    %1158 = vmatprep.subr.mxu0 0.0
    %1159 = vmatpush1.msra.mxu0 0.0
    %1160 = vmatprep.subr.mxu0 0.0
    %1161 = vmatpush1.msra.mxu0 0.0
    %1162 = vmatprep.subr.mxu0 0.0
    %1163 = vmatpush1.msra.mxu0 0.0
    %1164 = vmatprep.subr.mxu0 0.0
    %1165 = vmatpush1.msra.mxu0 0.0
    %1166 = vmatprep.subr.mxu0 0.0
    %1167 = vmatpush1.msra.mxu0 0.0
    %1168 = vmatprep.subr.mxu0 0.0
    %1169 = vmatpush1.msra.mxu0 0.0
    %1170 = vmatprep.subr.mxu0 0.0
    %1171 = vmatpush1.msra.mxu0 0.0
    %1172 = vmatprep.subr.mxu0 0.0
    %1173 = vmatpush1.msra.mxu0 0.0
    %1174 = vmatprep.subr.mxu0 0.0
    %1175 = vmatpush1.msra.mxu0 0.0
    %1176 = vmatprep.subr.mxu0 0.0
    %1177 = vmatpush1.msra.mxu0 0.0
    %1178 = vmatprep.subr.mxu0 0.0
    %1179 = vmatpush1.msra.mxu0 0.0
    %1180 = vmatprep.subr.mxu0 0.0
    %1181 = vmatpush1.msra.mxu0 0.0
    %1182 = vmatprep.subr.mxu0 0.0
    %1183 = vmatpush1.msra.mxu0 0.0
    %1184 = vmatprep.subr.mxu0 0.0
    %1185 = vmatpush1.msra.mxu0 0.0
    %1186 = vmatprep.subr.mxu0 0.0
    %1187 = vmatpush1.msra.mxu0 0.0
    %1188 = vmatprep.subr.mxu0 0.0
    %1189 = vmatpush1.msra.mxu0 0.0
    %1190 = vmatprep.subr.mxu0 0.0
    %1191 = vmatpush1.msra.mxu0 0.0
    %1192 = vmatprep.subr.mxu0 0.0
    %1193 = vmatpush1.msra.mxu0 0.0
    %1194 = vmatprep.subr.mxu0 0.0
    %1195 = vmatpush1.msra.mxu0 0.0
    %1196 = vmatprep.subr.mxu0 0.0
    %1197 = vmatpush1.msra.mxu0 0.0
    %1198 = vmatprep.mubr.f32.mxu0 0.0
    %1199 = vmatmul.mubr.f32.gmra.mrb[0].mxu0 %v1132
    %v1200 = vpop.f32.mrb[0].mxu0
    %v1201 = vadd.f32 0.0, %v1200
    %v1202 = vpop.f32.mrb[0].mxu0
    %1203 = vdwg.mxu0
    %v1205 = vrot.slane %v1201, 2
    %v1207 = vadd.f32 %v732, %v1205
    %v1208 = vtanh.pop %v1207
    %v1210 = vrot.slane %v1208, 6
    %v1211 = vsel %vm107, %v1210, 0
    %1213 = vmatprep.subr.mxu0 0.0
    %1214 = vmatpush1.msra.mxu0 %v17
    %1215 = vmatprep.subr.mxu0 0.0
    %1216 = vmatpush1.msra.mxu0 %v18
    %1217 = vmatprep.subr.mxu0 0.0
    %1218 = vmatpush1.msra.mxu0 %v19
    %1219 = vmatprep.subr.mxu0 0.0
    %1220 = vmatpush1.msra.mxu0 %v20
    %1221 = vmatprep.subr.mxu0 0.0
    %1222 = vmatpush1.msra.mxu0 0.0
    %1223 = vmatprep.subr.mxu0 0.0
    %1224 = vmatpush1.msra.mxu0 0.0
    %1225 = vmatprep.subr.mxu0 0.0
    %1226 = vmatpush1.msra.mxu0 0.0
    %1227 = vmatprep.subr.mxu0 0.0
    %1228 = vmatpush1.msra.mxu0 0.0
    %1229 = vmatprep.subr.mxu0 0.0
    %1230 = vmatpush1.msra.mxu0 0.0
    %1231 = vmatprep.subr.mxu0 0.0
    %1232 = vmatpush1.msra.mxu0 0.0
    %1233 = vmatprep.subr.mxu0 0.0
    %1234 = vmatpush1.msra.mxu0 0.0
    %1235 = vmatprep.subr.mxu0 0.0
    %1236 = vmatpush1.msra.mxu0 0.0
    %1237 = vmatprep.subr.mxu0 0.0
    %1238 = vmatpush1.msra.mxu0 0.0
    %1239 = vmatprep.subr.mxu0 0.0
    %1240 = vmatpush1.msra.mxu0 0.0
    %1241 = vmatprep.subr.mxu0 0.0
    %1242 = vmatpush1.msra.mxu0 0.0
    %1243 = vmatprep.subr.mxu0 0.0
    %1244 = vmatpush1.msra.mxu0 0.0
    %1245 = vmatprep.subr.mxu0 0.0
    %1246 = vmatpush1.msra.mxu0 0.0
    %1247 = vmatprep.subr.mxu0 0.0
    %1248 = vmatpush1.msra.mxu0 0.0
    %1249 = vmatprep.subr.mxu0 0.0
    %1250 = vmatpush1.msra.mxu0 0.0
    %1251 = vmatprep.subr.mxu0 0.0
    %1252 = vmatpush1.msra.mxu0 0.0
    %1253 = vmatprep.subr.mxu0 0.0
    %1254 = vmatpush1.msra.mxu0 0.0
    %1255 = vmatprep.subr.mxu0 0.0
    %1256 = vmatpush1.msra.mxu0 0.0
    %1257 = vmatprep.subr.mxu0 0.0
    %1258 = vmatpush1.msra.mxu0 0.0
    %1259 = vmatprep.subr.mxu0 0.0
    %1260 = vmatpush1.msra.mxu0 0.0
    %1261 = vmatprep.subr.mxu0 0.0
    %1262 = vmatpush1.msra.mxu0 0.0
    %1263 = vmatprep.subr.mxu0 0.0
    %1264 = vmatpush1.msra.mxu0 0.0
    %1265 = vmatprep.subr.mxu0 0.0
    %1266 = vmatpush1.msra.mxu0 0.0
    %1267 = vmatprep.subr.mxu0 0.0
    %1268 = vmatpush1.msra.mxu0 0.0
    %1269 = vmatprep.subr.mxu0 0.0
    %1270 = vmatpush1.msra.mxu0 0.0
    %1271 = vmatprep.subr.mxu0 0.0
    %1272 = vmatpush1.msra.mxu0 0.0
    %1273 = vmatprep.subr.mxu0 0.0
    %1274 = vmatpush1.msra.mxu0 0.0
    %1275 = vmatprep.subr.mxu0 0.0
    %1276 = vmatpush1.msra.mxu0 0.0
    %1277 = vmatprep.mubr.f32.mxu0 0.0
    %1278 = vmatmul.mubr.f32.gmra.mrb[0].mxu0 %v1211
    %v1279 = vpop.f32.mrb[0].mxu0
    %v1280 = vadd.f32 0.0, %v1279
    %v1281 = vpop.f32.mrb[0].mxu0
    %1282 = vdwg.mxu0
    %v1284 = vrot.slane %v1280, 1
    %v1286 = vadd.f32 %v732, %v1284
    %v1287 = vtanh.pop %v1286
    %v1289 = vrot.slane %v659, 7
    %v1292 = vrot.slane %v1287, 6
    %vm1294 = vcmask 1040384
    %v1295 = vsel %vm1294, %v1289, %v1292
    %v1296 = vlaneseq
    %v1297 = vshrl.u32 %v1296, 7
    %v1298 = vsub.s32 0, %v1297
    %v1299 = vrot.slane %v26, %v1298
    %v1301 = vsel %vm107, %v1295, 0
    %1303 = vmatprep.subr.mxu0 0.0
    %1304 = vmatpush1.msra.mxu0 %v22
    %1305 = vmatprep.subr.mxu0 0.0
    %1306 = vmatpush1.msra.mxu0 %v23
    %1307 = vmatprep.subr.mxu0 0.0
    %1308 = vmatpush1.msra.mxu0 %v24
    %1309 = vmatprep.subr.mxu0 0.0
    %1310 = vmatpush1.msra.mxu0 %v25
    %1311 = vmatprep.subr.mxu0 0.0
    %1312 = vmatpush1.msra.mxu0 0.0
    %1313 = vmatprep.subr.mxu0 0.0
    %1314 = vmatpush1.msra.mxu0 0.0
    %1315 = vmatprep.subr.mxu0 0.0
    %1316 = vmatpush1.msra.mxu0 0.0
    %1317 = vmatprep.subr.mxu0 0.0
    %1318 = vmatpush1.msra.mxu0 0.0
    %1319 = vmatprep.subr.mxu0 0.0
    %1320 = vmatpush1.msra.mxu0 0.0
    %1321 = vmatprep.subr.mxu0 0.0
    %1322 = vmatpush1.msra.mxu0 0.0
    %1323 = vmatprep.subr.mxu0 0.0
    %1324 = vmatpush1.msra.mxu0 0.0
    %1325 = vmatprep.subr.mxu0 0.0
    %1326 = vmatpush1.msra.mxu0 0.0
    %1327 = vmatprep.subr.mxu0 0.0
    %1328 = vmatpush1.msra.mxu0 0.0
    %1329 = vmatprep.subr.mxu0 0.0
    %1330 = vmatpush1.msra.mxu0 0.0
    %1331 = vmatprep.subr.mxu0 0.0
    %1332 = vmatpush1.msra.mxu0 0.0
    %1333 = vmatprep.subr.mxu0 0.0
    %1334 = vmatpush1.msra.mxu0 0.0
    %1335 = vmatprep.subr.mxu0 0.0
    %1336 = vmatpush1.msra.mxu0 0.0
    %1337 = vmatprep.subr.mxu0 0.0
    %1338 = vmatpush1.msra.mxu0 0.0
    %1339 = vmatprep.subr.mxu0 0.0
    %1340 = vmatpush1.msra.mxu0 0.0
    %1341 = vmatprep.subr.mxu0 0.0
    %1342 = vmatpush1.msra.mxu0 0.0
    %1343 = vmatprep.subr.mxu0 0.0
    %1344 = vmatpush1.msra.mxu0 0.0
    %1345 = vmatprep.subr.mxu0 0.0
    %1346 = vmatpush1.msra.mxu0 0.0
    %1347 = vmatprep.subr.mxu0 0.0
    %1348 = vmatpush1.msra.mxu0 0.0
    %1349 = vmatprep.subr.mxu0 0.0
    %1350 = vmatpush1.msra.mxu0 0.0
    %1351 = vmatprep.subr.mxu0 0.0
    %1352 = vmatpush1.msra.mxu0 0.0
    %1353 = vmatprep.subr.mxu0 0.0
    %1354 = vmatpush1.msra.mxu0 0.0
    %1355 = vmatprep.subr.mxu0 0.0
    %1356 = vmatpush1.msra.mxu0 0.0
    %1357 = vmatprep.subr.mxu0 0.0
    %1358 = vmatpush1.msra.mxu0 0.0
    %1359 = vmatprep.subr.mxu0 0.0
    %1360 = vmatpush1.msra.mxu0 0.0
    %1361 = vmatprep.subr.mxu0 0.0
    %1362 = vmatpush1.msra.mxu0 0.0
    %1363 = vmatprep.subr.mxu0 0.0
    %1364 = vmatpush1.msra.mxu0 0.0
    %1365 = vmatprep.subr.mxu0 0.0
    %1366 = vmatpush1.msra.mxu0 0.0
    %1367 = vmatprep.mubr.f32.mxu0 0.0
    %1368 = vmatmul.mubr.f32.gmra.mrb[0].mxu0 %v1301
    %v1369 = vpop.f32.mrb[0].mxu0
    %v1370 = vadd.f32 %v1299, %v1369
    %v1371 = vpop.f32.mrb[0].mxu0
    %1372 = vdwg.mxu0
    %vm1373 = vcmask 779264
    %1374 = vst.msk [vmem:[#allocation2] sm:$0x3] %vm1373, %v1370
    // Predicated region
    $region14: #{tpu_custom_call.1} parent=1 // pred_check
      _
    $region15: #{tpu_custom_call.1} parent=1 // pred_check_branch
      %1376 = sbr.rel (0) target = $region17
    $region16: #{tpu_custom_call.1} parent=1 // pred_region
      %s1378 = ssub.s32 32, 32
      %1379 = vsyncadd [#allocation3], %s1378
      %s1381 = sshll.u32 [#allocation2], 4
      %s1382 = int_to_ptr.vmem [resolvable:$true] %s1381
      %1384 = dma.vmem_to_hbm [thread:$0]  %s1382, 32, %s3, [#allocation3]
    $region17: #{tpu_custom_call.1} parent=1 // pred_fallthru
      _
    // Predicated region
    $region18: #{tpu_custom_call.1} parent=1 // pred_check
      _
    $region19: #{tpu_custom_call.1} parent=1 // pred_check_branch
      %1386 = sbr.rel (0) target = $region21
    $region20: #{tpu_custom_call.1} parent=1 // pred_region
      %1387 = dma.done [#allocation3], 32
    $region21: #{tpu_custom_call.1} parent=1 // pred_fallthru
      _
    %1388 = vsyncpa [#allocation3], 1

</llo_original>
